<compile_context>
chip_gen: v6e
topology: v6e:2x2x1
jax: 0.10.0
libtpu: 0.0.40
codegen_flags: <defaults>
</compile_context>

<pallas_src>
import math
from functools import partial

import jax
import jax.numpy as jnp
from jax import lax
from jax.experimental import pallas as pl
from jax.experimental.pallas import tpu as pltpu

F32 = jnp.float32
BF16 = jnp.bfloat16
BN_EPS = 1e-5
EXPANSION = 4                      # Bottleneck.expansion
LAYERS = [3, 4, 23, 3]             # ResNet-101
_VMEM_LIMIT = 32 * 1024 * 1024     # per-kernel scoped VMEM budget (v7x-safe, < 64 MiB)


def _round_up(v, m):
    return -(-v // m) * m


# ----------------------- fused tiled conv matmul kernel -----------------------

def _make_fused_kernel(has_res, relu):
    """out = [relu]( acc * scale + shift [+ residual] ), acc = sum_k A_k @ B_k."""

    def _epilogue(acc, sc, sh, res):
        y = acc * sc + sh
        if res is not None:
            y = y + res.astype(jnp.float32)
        if relu:
            y = jnp.maximum(y, 0.0)
        return y

    if has_res:
        def kernel(a_ref, b_ref, sc_ref, sh_ref, r_ref, o_ref, acc_ref):
            @pl.when(pl.program_id(2) == 0)
            def _():
                acc_ref[...] = jnp.zeros_like(acc_ref)
            acc_ref[...] += jnp.dot(a_ref[...], b_ref[...],
                                    preferred_element_type=jnp.float32)

            @pl.when(pl.program_id(2) == pl.num_programs(2) - 1)
            def _():
                o_ref[...] = _epilogue(acc_ref[...], sc_ref[...], sh_ref[...],
                                       r_ref[...]).astype(o_ref.dtype)
    else:
        def kernel(a_ref, b_ref, sc_ref, sh_ref, o_ref, acc_ref):
            @pl.when(pl.program_id(2) == 0)
            def _():
                acc_ref[...] = jnp.zeros_like(acc_ref)
            acc_ref[...] += jnp.dot(a_ref[...], b_ref[...],
                                    preferred_element_type=jnp.float32)

            @pl.when(pl.program_id(2) == pl.num_programs(2) - 1)
            def _():
                o_ref[...] = _epilogue(acc_ref[...], sc_ref[...], sh_ref[...],
                                       None).astype(o_ref.dtype)
    return kernel


def _pick_tiles(M, K, N):
    # M: one sublane-aligned tile if small, otherwise 256-row tiles.
    mr = _round_up(M, 8)
    if mr <= 512:
        tm, mp = mr, mr
    else:
        tm, mp = 256, _round_up(M, 256)
    # N: lane-dense tiles when the channel count is a multiple of 128.
    tn = min(N, 256) if N % 128 == 0 else N
    # K: single full tile when small, otherwise 128-multiple tiles (zero-padded).
    if K <= 1024:
        tk, kp = K, K
    else:
        kp = _round_up(K, 128)
        tk = next(t for t in (512, 384, 256, 128) if kp % t == 0)
    return tm, tn, tk, mp, kp


def _fused_matmul(a, b, scale, shift, res, relu, out_dtype):
    """a:(M,K) bf16, b:(K,N) bf16, scale/shift:(N,) f32, res:(M,N) bf16 or None."""
    M, K = a.shape
    N = b.shape[1]
    tm, tn, tk, mp, kp = _pick_tiles(M, K, N)

    a = jnp.pad(a.astype(BF16), ((0, mp - M), (0, kp - K)))
    b = jnp.pad(b.astype(BF16), ((0, kp - K), (0, 0)))
    sc = scale.astype(F32).reshape(1, N)
    sh = shift.astype(F32).reshape(1, N)

    in_specs = [pl.BlockSpec((tm, tk), lambda i, j, k: (i, k)),
                pl.BlockSpec((tk, tn), lambda i, j, k: (k, j)),
                pl.BlockSpec((1, tn), lambda i, j, k: (0, j)),
                pl.BlockSpec((1, tn), lambda i, j, k: (0, j))]
    args = [a, b, sc, sh]
    if res is not None:
        in_specs.append(pl.BlockSpec((tm, tn), lambda i, j, k: (i, j)))
        args.append(jnp.pad(res.astype(BF16), ((0, mp - M), (0, 0))))

    out = pl.pallas_call(
        _make_fused_kernel(res is not None, relu),
        out_shape=jax.ShapeDtypeStruct((mp, N), out_dtype),
        grid_spec=pltpu.PrefetchScalarGridSpec(
            num_scalar_prefetch=0,
            grid=(mp // tm, N // tn, kp // tk),
            in_specs=in_specs,
            out_specs=pl.BlockSpec((tm, tn), lambda i, j, k: (i, j)),
            scratch_shapes=[pltpu.VMEM((tm, tn), jnp.float32)]),
        compiler_params=pltpu.CompilerParams(
            dimension_semantics=("parallel", "parallel", "arbitrary"),
            vmem_limit_bytes=_VMEM_LIMIT),
    )(*args)
    return out[:M] if mp != M else out


# ------------------------------ conv wrappers ---------------------------------

def _im2col(x, kh, kw, stride, pad, dil):
    """x: NHWC.  Returns (A, Ho, Wo), A:(N*Ho*Wo, kh*kw*Cin), tap order (ky,kx,cin)."""
    N, H, W, Cin = x.shape
    Ho = (H + 2 * pad - dil * (kh - 1) - 1) // stride + 1
    Wo = (W + 2 * pad - dil * (kw - 1) - 1) // stride + 1
    if kh == 1 and kw == 1 and pad == 0:
        return x[:, ::stride, ::stride, :].reshape(N * Ho * Wo, Cin), Ho, Wo
    xp = jnp.pad(x, ((0, 0), (pad, pad), (pad, pad), (0, 0)))
    cols = []
    for ky in range(kh):
        for kx in range(kw):
            ys, xs = ky * dil, kx * dil
            cols.append(xp[:, ys: ys + (Ho - 1) * stride + 1: stride,
                            xs: xs + (Wo - 1) * stride + 1: stride, :])
    a = jnp.concatenate(cols, axis=-1).reshape(N * Ho * Wo, kh * kw * Cin)
    return a, Ho, Wo


@partial(jax.jit,
         static_argnames=("kh", "kw", "stride", "pad", "dil", "relu", "out_dtype"))
def conv_bn_act(x, wmat, scale, shift, residual,
                *, kh, kw, stride, pad, dil, relu, out_dtype):
    """Conv (im2col + fused matmul) with BN scale/shift, optional residual, optional ReLU."""
    N, H, W, _ = x.shape
    Cout = wmat.shape[1]
    a, Ho, Wo = _im2col(x, kh, kw, stride, pad, dil)
    res = None if residual is None else residual.reshape(-1, Cout)
    out = _fused_matmul(a, wmat, scale, shift, res, relu, out_dtype)
    return out.reshape(N, Ho, Wo, Cout)


# ------------------------------ max pooling -----------------------------------

def _maxpool_kernel(t_ref, o_ref):
    acc = t_ref[0].astype(jnp.float32)
    for i in range(1, 9):
        acc = jnp.maximum(acc, t_ref[i].astype(jnp.float32))
    o_ref[...] = acc.astype(o_ref.dtype)


@jax.jit
def maxpool_3x3_s2_p1_ceil(x):
    """MaxPool2d(kernel_size=3, stride=2, padding=1, ceil_mode=True) on NHWC."""
    N, H, W, C = x.shape
    Ho = -(-(H - 1) // 2) + 1
    Wo = -(-(W - 1) // 2) + 1
    need_h = (Ho - 1) * 2 + 3
    need_w = (Wo - 1) * 2 + 3
    xp = jnp.pad(x, ((0, 0), (1, need_h - H - 1), (1, need_w - W - 1), (0, 0)),
                 constant_values=-1e30)
    taps = [xp[:, ky: ky + (Ho - 1) * 2 + 1: 2, kx: kx + (Wo - 1) * 2 + 1: 2, :]
            for ky in range(3) for kx in range(3)]
    t = jnp.stack(taps, axis=0).reshape(9, N * Ho * Wo, C)
    M = N * Ho * Wo
    tm = min(_round_up(M, 8), 1024)
    mp = _round_up(M, tm)
    t = jnp.pad(t, ((0, 0), (0, mp - M), (0, 0)))
    out = pl.pallas_call(
        _maxpool_kernel,
        out_shape=jax.ShapeDtypeStruct((mp, C), x.dtype),
        grid_spec=pltpu.PrefetchScalarGridSpec(
            num_scalar_prefetch=0,
            grid=(mp // tm,),
            in_specs=[pl.BlockSpec((9, tm, C), lambda i: (0, i, 0))],
            out_specs=pl.BlockSpec((tm, C), lambda i: (i, 0))),
        compiler_params=pltpu.CompilerParams(
            dimension_semantics=("parallel",),
            vmem_limit_bytes=_VMEM_LIMIT),
    )(t)
    return out[:M].reshape(N, Ho, Wo, C)


# ------------------------------ ASPP classifier -------------------------------

@jax.jit
def classifier_fwd(x, wcat, scale, shift):
    """Four dilated 3x3 branches fused into one K-concatenated accumulating matmul."""
    N, H, W, _ = x.shape
    cols = []
    for d in (6, 12, 18, 24):
        a, Ho, Wo = _im2col(x, 3, 3, 1, d, d)
        cols.append(a)
    a = jnp.concatenate(cols, axis=1)
    out = _fused_matmul(a, wcat, scale, shift, None, relu=False, out_dtype=F32)
    return out.reshape(N, Ho, Wo, wcat.shape[1])


# ------------------------------ parameters ------------------------------------

class _KeyGen:
    def __init__(self, seed):
        self._key = jax.random.PRNGKey(seed)
        self._i = 0

    def next(self):
        self._i += 1
        return jax.random.fold_in(self._key, self._i)


def _conv_wmat(kg, cout, cin, kh, kw):
    # matches the PyTorch init loop: m.weight.data.normal_(0, 0.01); stored pre-reshaped
    # to the (kh*kw*cin, cout) matmul layout in bf16 (MXU-native).
    w = 0.01 * jax.random.normal(kg.next(), (cout, cin, kh, kw), F32)
    return jnp.transpose(w, (2, 3, 1, 0)).reshape(kh * kw * cin, cout).astype(BF16)


def _init_bn(c):
    # weight=1, bias=0, running_mean=0, running_var=1 folded into per-channel scale/shift.
    scale = jnp.full((c,), 1.0 / math.sqrt(1.0 + BN_EPS), F32)
    shift = jnp.zeros((c,), F32)
    return scale, shift


def init_resnet(num_classes, seed=0):
    kg = _KeyGen(seed)
    params = {"w1": _conv_wmat(kg, 64, 3, 7, 7)}
    params["bn1_s"], params["bn1_b"] = _init_bn(64)
    inplanes = 64

    def make_layer(planes, blocks, stride, dilation):
        nonlocal inplanes
        with_down = (stride != 1 or inplanes != planes * EXPANSION
                     or dilation == 2 or dilation == 4)
        bps = []
        for bi in range(blocks):
            p = {"w1": _conv_wmat(kg, planes, inplanes, 1, 1),
                 "w2": _conv_wmat(kg, planes, planes, 3, 3),
                 "w3": _conv_wmat(kg, planes * EXPANSION, planes, 1, 1)}
            p["bn1_s"], p["bn1_b"] = _init_bn(planes)
            p["bn2_s"], p["bn2_b"] = _init_bn(planes)
            p["bn3_s"], p["bn3_b"] = _init_bn(planes * EXPANSION)
            if bi == 0 and with_down:
                p["wd"] = _conv_wmat(kg, planes * EXPANSION, inplanes, 1, 1)
                p["bnd_s"], p["bnd_b"] = _init_bn(planes * EXPANSION)
            inplanes = planes * EXPANSION
            bps.append(p)
        return {"blocks": bps, "stride": stride, "dilation": dilation}

    params["layer1"] = make_layer(64, LAYERS[0], 1, 1)
    params["layer2"] = make_layer(128, LAYERS[1], 2, 1)
    params["layer3"] = make_layer(256, LAYERS[2], 1, 2)
    params["layer4"] = make_layer(512, LAYERS[3], 1, 4)

    # Classifier_Module: 4 x (3x3 conv, dilation/pad 6/12/18/24, bias=True), outputs summed.
    # Output channels zero-padded to a lane-dense 128 (sliced back in the wrapper).
    # TODO(synk): classifier conv biases use zero init (ResNet init loop only sets weights).
    cls_pad = _round_up(max(num_classes, 1), 128)
    mats = [jnp.pad(_conv_wmat(kg, num_classes, 2048, 3, 3),
                    ((0, 0), (0, cls_pad - num_classes))) for _ in range(4)]
    params["cls_w"] = jnp.concatenate(mats, axis=0)          # (4*9*2048, cls_pad)
    params["cls_scale"] = jnp.ones((cls_pad,), F32)
    params["cls_shift"] = jnp.zeros((cls_pad,), F32)         # summed branch biases (zero)
    return params


# ------------------------------ forward pass ----------------------------------

def _bottleneck_fwd(p, x, stride, dilation):
    out = conv_bn_act(x, p["w1"], p["bn1_s"], p["bn1_b"], None,
                      kh=1, kw=1, stride=stride, pad=0, dil=1,
                      relu=True, out_dtype=BF16)
    out = conv_bn_act(out, p["w2"], p["bn2_s"], p["bn2_b"], None,
                      kh=3, kw=3, stride=1, pad=dilation, dil=dilation,
                      relu=True, out_dtype=BF16)
    if "wd" in p:
        res = conv_bn_act(x, p["wd"], p["bnd_s"], p["bnd_b"], None,
                          kh=1, kw=1, stride=stride, pad=0, dil=1,
                          relu=False, out_dtype=BF16)
    else:
        res = x
    # conv3 + bn3 + residual add + ReLU fused into one kernel epilogue.
    return conv_bn_act(out, p["w3"], p["bn3_s"], p["bn3_b"], res,
                       kh=1, kw=1, stride=1, pad=0, dil=1,
                       relu=True, out_dtype=BF16)


def resnet_fwd(params, x_nchw, num_classes):
    x = jnp.transpose(x_nchw, (0, 2, 3, 1)).astype(BF16)      # NCHW -> NHWC (bf16 trunk)
    x = conv_bn_act(x, params["w1"], params["bn1_s"], params["bn1_b"], None,
                    kh=7, kw=7, stride=2, pad=3, dil=1, relu=True, out_dtype=BF16)
    x = maxpool_3x3_s2_p1_ceil(x)
    for name in ("layer1", "layer2", "layer3", "layer4"):
        lp = params[name]
        x = _bottleneck_fwd(lp["blocks"][0], x, lp["stride"], lp["dilation"])
        for bp in lp["blocks"][1:]:
            x = _bottleneck_fwd(bp, x, 1, lp["dilation"])
    y = classifier_fwd(x, params["cls_w"], params["cls_scale"], params["cls_shift"])
    y = y[..., :num_classes]
    return jnp.transpose(y, (0, 3, 1, 2))                     # NHWC -> NCHW


# ---------------------------------- main ---------------------------------------

if __name__ == "__main__":
    num_classes = 4
    params = init_resnet(num_classes, seed=0)
    x = jax.random.normal(jax.random.PRNGKey(0), (1, 3, 33, 33), F32)   # NCHW

    # --- sanity 1: fused tiled matmul (K-reduction grid, residual + relu epilogue) ---
    k1, k2, k3, k4, k5 = jax.random.split(jax.random.PRNGKey(1), 5)
    A = jax.random.normal(k1, (96, 1100), F32).astype(BF16)
    B = jax.random.normal(k2, (1100, 256), F32).astype(BF16)
    sc = 1.0 + 0.1 * jax.random.normal(k3, (256,), F32)
    sh = 0.1 * jax.random.normal(k4, (256,), F32)
    R = jax.random.normal(k5, (96, 256), F32).astype(BF16)
    got = _fused_matmul(A, B, sc, sh, R, relu=True, out_dtype=F32)
    ref = jnp.maximum(jnp.dot(A.astype(F32), B.astype(F32)) * sc + sh + R.astype(F32), 0.0)
    assert bool(jnp.allclose(got, ref, rtol=2e-2, atol=2e-2)), "fused matmul mismatch"

    # --- sanity 2: stem conv (im2col path + BN/ReLU epilogue) vs lax.conv reference ---
    xh = jnp.transpose(x, (0, 2, 3, 1)).astype(BF16)
    y_k = conv_bn_act(xh, params["w1"], params["bn1_s"], params["bn1_b"], None,
                      kh=7, kw=7, stride=2, pad=3, dil=1, relu=True, out_dtype=F32)
    w_hwio = params["w1"].astype(F32).reshape(7, 7, 3, 64)
    y_ref = lax.conv_general_dilated(xh.astype(F32), w_hwio, window_strides=(2, 2),
                                     padding=((3, 3), (3, 3)), rhs_dilation=(1, 1),
                                     dimension_numbers=("NHWC", "HWIO", "NHWC"))
    y_ref = jnp.maximum(y_ref * params["bn1_s"] + params["bn1_b"], 0.0)
    assert bool(jnp.allclose(y_k, y_ref, rtol=5e-2, atol=1e-2)), "stem conv mismatch"

    # --- full ResNet / DeepLab forward ---
    out = resnet_fwd(params, x, num_classes)
    out = jax.block_until_ready(out)
    assert out.shape == (1, num_classes, 5, 5), out.shape
    assert bool(jnp.all(jnp.isfinite(out)))
    print("KERNEL_OK")
</pallas_src>

<mosaic_0001>
module attributes {stable_mosaic.version = 11 : i64} {
  func.func @kernel(%arg0: i32, %arg1: i32, %arg2: i32, %arg3: memref<96x384xbf16, #tpu.memory_space<vmem>>, %arg4: memref<384x256xbf16, #tpu.memory_space<vmem>>, %arg5: memref<1x256xf32, #tpu.memory_space<vmem>>, %arg6: memref<1x256xf32, #tpu.memory_space<vmem>>, %arg7: memref<96x256xbf16, #tpu.memory_space<vmem>>, %arg8: memref<96x256xf32, #tpu.memory_space<vmem>>, %arg9: memref<96x256xf32, #tpu.memory_space<vmem>>) attributes {dimension_semantics = [#tpu.dimension_semantics<parallel>, #tpu.dimension_semantics<parallel>, #tpu.dimension_semantics<arbitrary>], iteration_bounds = array<i64: 1, 1, 3>, scalar_prefetch = 0 : i64, scratch_operands = 1 : i64, tpu.core_type = #tpu.core_type<tc>, window_params = [{transform_indices = @transform_0, window_bounds = array<i64: 96, 384>}, {transform_indices = @transform_1, window_bounds = array<i64: 384, 256>}, {transform_indices = @transform_2, window_bounds = array<i64: 1, 256>}, {transform_indices = @transform_3, window_bounds = array<i64: 1, 256>}, {transform_indices = @transform_4, window_bounds = array<i64: 96, 256>}, {transform_indices = @transform_5, window_bounds = array<i64: 96, 256>}]} {
    %c0_i32 = arith.constant 0 : i32
    %0 = arith.cmpi eq, %arg2, %c0_i32 : i32
    %1 = arith.extui %0 : i1 to i32
    %c0_i32_0 = arith.constant 0 : i32
    %2 = arith.cmpi ne, %1, %c0_i32_0 : i32
    scf.if %2 {
      %cst_9 = arith.constant 0.000000e+00 : f32
      %12 = vector.broadcast %cst_9 : f32 to vector<96x256xf32>
      %c0_10 = arith.constant 0 : index
      %c0_11 = arith.constant 0 : index
      %13 = vector.load %arg9[%c0_10, %c0_11] : memref<96x256xf32, #tpu.memory_space<vmem>>, vector<96x256xf32>
      tpu.vector_store %arg9[%c0_10, %c0_11], %12 {strides = array<i32>} : memref<96x256xf32, #tpu.memory_space<vmem>>, vector<96x256xf32>,
    } else {
    }
    %c0 = arith.constant 0 : index
    %c0_1 = arith.constant 0 : index
    %3 = vector.load %arg9[%c0, %c0_1] : memref<96x256xf32, #tpu.memory_space<vmem>>, vector<96x256xf32>
    %c0_2 = arith.constant 0 : index
    %c0_3 = arith.constant 0 : index
    %4 = vector.load %arg3[%c0_2, %c0_3] : memref<96x384xbf16, #tpu.memory_space<vmem>>, vector<96x384xbf16>
    %c0_4 = arith.constant 0 : index
    %c0_5 = arith.constant 0 : index
    %5 = vector.load %arg4[%c0_4, %c0_5] : memref<384x256xbf16, #tpu.memory_space<vmem>>, vector<384x256xbf16>
    %cst = arith.constant dense<0.000000e+00> : vector<96x256xf32>
    %6 = tpu.matmul %4, %5, %cst {dimension_numbers = #tpu.dot_dimension_numbers<[1], [0], [0], [1], [0, 0, 1, 1], [], []>} : vector<96x384xbf16>, vector<384x256xbf16>, vector<96x256xf32> -> vector<96x256xf32>
    %7 = arith.addf %3, %6 : vector<96x256xf32>
    %c0_6 = arith.constant 0 : index
    %c0_7 = arith.constant 0 : index
    %8 = vector.load %arg9[%c0_6, %c0_7] : memref<96x256xf32, #tpu.memory_space<vmem>>, vector<96x256xf32>
    tpu.vector_store %arg9[%c0_6, %c0_7], %7 {strides = array<i32>} : memref<96x256xf32, #tpu.memory_space<vmem>>, vector<96x256xf32>,
    %c2_i32 = arith.constant 2 : i32
    %9 = arith.cmpi eq, %arg2, %c2_i32 : i32
    %10 = arith.extui %9 : i1 to i32
    %c0_i32_8 = arith.constant 0 : i32
    %11 = arith.cmpi ne, %10, %c0_i32_8 : i32
    scf.if %11 {
      %c0_9 = arith.constant 0 : index
      %c0_10 = arith.constant 0 : index
      %12 = vector.load %arg9[%c0_9, %c0_10] : memref<96x256xf32, #tpu.memory_space<vmem>>, vector<96x256xf32>
      %c0_11 = arith.constant 0 : index
      %c0_12 = arith.constant 0 : index
      %13 = vector.load %arg5[%c0_11, %c0_12] : memref<1x256xf32, #tpu.memory_space<vmem>>, vector<1x256xf32>
      %c0_13 = arith.constant 0 : index
      %c0_14 = arith.constant 0 : index
      %14 = vector.load %arg6[%c0_13, %c0_14] : memref<1x256xf32, #tpu.memory_space<vmem>>, vector<1x256xf32>
      %c0_15 = arith.constant 0 : index
      %c0_16 = arith.constant 0 : index
      %15 = vector.load %arg7[%c0_15, %c0_16] : memref<96x256xbf16, #tpu.memory_space<vmem>>, vector<96x256xbf16>
      %16 = vector.broadcast %13 : vector<1x256xf32> to vector<96x256xf32>
      %17 = arith.mulf %12, %16 : vector<96x256xf32>
      %18 = vector.broadcast %14 : vector<1x256xf32> to vector<96x256xf32>
      %19 = arith.addf %17, %18 : vector<96x256xf32>
      %20 = arith.extf %15 : vector<96x256xbf16> to vector<96x256xf32>
      %21 = arith.addf %19, %20 : vector<96x256xf32>
      %cst_17 = arith.constant 0.000000e+00 : f32
      %22 = vector.broadcast %cst_17 : f32 to vector<96x256xf32>
      %23 = arith.maximumf %21, %22 : vector<96x256xf32>
      %c0_18 = arith.constant 0 : index
      %c0_19 = arith.constant 0 : index
      %24 = vector.load %arg8[%c0_18, %c0_19] : memref<96x256xf32, #tpu.memory_space<vmem>>, vector<96x256xf32>
      tpu.vector_store %arg8[%c0_18, %c0_19], %23 {strides = array<i32>} : memref<96x256xf32, #tpu.memory_space<vmem>>, vector<96x256xf32>,
    } else {
    }
    return
  }
  func.func @transform_0(%arg0: i32, %arg1: i32, %arg2: i32) -> (i32, i32) {
    %c0_i32 = arith.constant 0 : i32
    return %arg0, %arg2 : i32, i32
  }
  func.func @transform_1(%arg0: i32, %arg1: i32, %arg2: i32) -> (i32, i32) {
    %c0_i32 = arith.constant 0 : i32
    return %arg2, %arg1 : i32, i32
  }
  func.func @transform_2(%arg0: i32, %arg1: i32, %arg2: i32) -> (i32, i32) {
    %c0_i32 = arith.constant 0 : i32
    %c0_i32_0 = arith.constant 0 : i32
    return %c0_i32, %arg1 : i32, i32
  }
  func.func @transform_3(%arg0: i32, %arg1: i32, %arg2: i32) -> (i32, i32) {
    %c0_i32 = arith.constant 0 : i32
    %c0_i32_0 = arith.constant 0 : i32
    return %c0_i32, %arg1 : i32, i32
  }
  func.func @transform_4(%arg0: i32, %arg1: i32, %arg2: i32) -> (i32, i32) {
    %c0_i32 = arith.constant 0 : i32
    return %arg0, %arg1 : i32, i32
  }
  func.func @transform_5(%arg0: i32, %arg1: i32, %arg2: i32) -> (i32, i32) {
    %c0_i32 = arith.constant 0 : i32
    return %arg0, %arg1 : i32, i32
  }
}

</mosaic_0001>

<llo_original>
// kernel: tpu_custom_call.1
$region0: #{tpu_custom_call.1}
  #allocation0 [shape = 'u32[]', space=smem, size = 0x4, offset = 0x4, fixed_abs, tag = 'smem constant byte address 0x4 - core index']
  #allocation1 [shape = 'u32[144,128]{1,0:T(1,128)}', space=vmem, size = 0x12000, scoped, tag = 'internal scratch']
  #allocation2 [shape = 'f32[96,256]{1,0:T(8,128)}', space=vmem, size = 0x18000, scoped, tag = 'scratch operand']
  %s0 = inlined_call_operand.hbm [shape: bf16[96,1152], index: 0, kind: input, shape index: {}]
  %s1 = inlined_call_operand.hbm [shape: bf16[1152,256], index: 1, kind: input, shape index: {}]
  %s2 = inlined_call_operand.vmem [shape: f32[1,256], index: 2, kind: input, shape index: {}]
  %s3 = inlined_call_operand.vmem [shape: f32[1,256], index: 3, kind: input, shape index: {}]
  %s4 = inlined_call_operand.hbm [shape: bf16[96,256], index: 4, kind: input, shape index: {}]
  %s5 = inlined_call_operand.hbm [shape: f32[96,256], index: 5, kind: output, shape index: {}]
  %s6 = sld [smem:[#allocation0]]
  $region73: #{tpu_custom_call.1} parent=0
    _
  %s8 = ssub.s32 1, %s6
  %s9 = scalar_select 0, %s8, %s6
  $region1: #{tpu_custom_call.1} parent=0
    #allocation3 [shape = 'u8[147456]{0}', space=vmem, size = 0x24000, scoped, tag = 'input window, operand 0']
    #allocation4 [shape = 's32[2]{0}', space=sflag, size = 0x8, scoped, tag = 'scoped memory for tpu_custom_call.1']
    #allocation5 [shape = 's32[2]{0}', space=sflag, size = 0x8, scoped, tag = 'scoped memory for tpu_custom_call.1']
    #allocation6 [shape = 'u8[393216]{0}', space=vmem, size = 0x60000, scoped, tag = 'input window, operand 1']
    #allocation7 [shape = 's32[2]{0}', space=sflag, size = 0x8, scoped, tag = 'scoped memory for tpu_custom_call.1']
    #allocation8 [shape = 'u8[49152]{0}', space=vmem, size = 0xc000, scoped, tag = 'input window, operand 4, single buffered']
    #allocation9 [shape = 'u8[98304]{0}', space=vmem, size = 0x18000, scoped, tag = 'output window, operand 0, single buffered']
    %10 = vsyncpa [#allocation4], 0
    %s11 = scalar_lea.sflag [#allocation4], 1
    %12 = vsyncpa %s11, 0
    %13 = vsyncpa [#allocation7], 0
    %s14 = scalar_lea.sflag [#allocation7], 1
    %15 = vsyncpa %s14, 0
    %16 = vsyncpa [#allocation5], 0
    loop: start=0, step=1, limit=5
    $region2: #{tpu_custom_call.1} parent=1 // loop_pre_header
      _
    $region3: #{tpu_custom_call.1} parent=1 // loop_header
      %s18 = sphi 0, %s22
      %p19 = scmp.ge.s32.totalorder %s18, 5
      %s25 = sphi 0, %s44
      %s26 = sphi 0, %s40
      %s27 = sphi 0, %s36
      %s28 = sphi 0, %s25
      %s29 = sphi 0, %s26
      %s30 = sphi 0, %s27
      %s31 = sphi 0, %s28
      %s32 = sphi 0, %s29
      %s33 = sphi 0, %s30
      %s49 = sphi 0, %s51
      %s52 = sphi 0, %s49
      %s53 = sphi 0, %s52
      %s69 = sphi 0, %s53
      %s77 = sphi 0, %s79
      %s80 = sphi 0, %s77
      %s81 = sphi 0, %s80
      %s97 = sphi 0, %s81
      %s103 = sphi 0, %s105
      %s106 = sphi 0, %s103
      %s107 = sphi 0, %s106
      %s123 = sphi 0, %s107
      %s129 = sphi 0, %s131
      %s132 = sphi 0, %s129
      %s133 = sphi 0, %s132
      %s149 = sphi 0, %s133
      %s157 = sphi 0, %s159
      %s160 = sphi 0, %s157
      %s161 = sphi 0, %s160
      %s177 = sphi 0, %s161
      %s185 = sphi 0, %s187
      %s188 = sphi 0, %s185
      %s189 = sphi 0, %s188
      %s205 = sphi 0, %s189
    $region4: #{tpu_custom_call.1} parent=1 // loop_header_branch
      %21 = sbr.rel (%p19) target = $region8
    $region5: #{tpu_custom_call.1} parent=1 // loop_body
      %s23 = ssub.s32 %s18, 1
      %s24 = ssub.s32 %s18, 2
      %s34 = sadd.s32 1, %s27
      %p35 = scmp.ge.s32.totalorder %s34, 3
      %s36 = scalar_select %p35, 0, %s34
      %s37 = sadd.s32 1, %s26
      %s38 = scalar_select %p35, %s37, %s26
      %p39 = scmp.ge.s32.totalorder %s38, 1
      %s40 = scalar_select %p39, 0, %s38
      %s41 = sadd.s32 1, %s25
      %s42 = scalar_select %p39, %s41, %s25
      %p43 = scmp.ge.s32.totalorder %s42, 1
      %s44 = scalar_select %p43, 0, %s42
      %s45 = ssub.s32 %s25, %s44
      %s46 = ssub.s32 %s27, %s36
      %s47 = sor.u32 %s45, %s46
      %p48 = scmp.eq.s32.totalorder %s47, 0
      %s50 = sadd.s32 %s49, 1
      %s51 = scalar_select %p48, %s49, %s50
      %p54 = pneg %p48
      %p55 = scmp.eq.s32.totalorder %s18, 2
      %p56 = por %p54, %p55
      %p57 = scmp.ne.s32.totalorder %s49, %s52
      %p58 = scmp.eq.s32.totalorder %s18, 0
      %p59 = por %p57, %p58
      %p60 = scmp.ne.s32.totalorder %s49, %s52
      %p61 = scmp.eq.s32.totalorder %s23, 2
      %p62 = por %p60, %p61
      %p63 = scmp.ne.s32.totalorder %s52, %s53
      %p64 = scmp.eq.s32.totalorder %s23, 0
      %p65 = por %p63, %p64
      %p66 = scmp.ne.s32.totalorder %s52, %s53
      %p67 = scmp.eq.s32.totalorder %s24, 2
      %p68 = por %p66, %p67
      %p70 = scmp.ne.s32.totalorder %s53, %s69
      %p71 = scmp.eq.s32.totalorder %s24, 0
      %p72 = por %p70, %p71
      %s73 = ssub.s32 %s27, %s36
      %s74 = ssub.s32 %s26, %s40
      %s75 = sor.u32 %s73, %s74
      %p76 = scmp.eq.s32.totalorder %s75, 0
      %s78 = sadd.s32 %s77, 1
      %s79 = scalar_select %p76, %s77, %s78
      %p82 = pneg %p76
      %p83 = scmp.eq.s32.totalorder %s18, 2
      %p84 = por %p82, %p83
      %p85 = scmp.ne.s32.totalorder %s77, %s80
      %p86 = scmp.eq.s32.totalorder %s18, 0
      %p87 = por %p85, %p86
      %p88 = scmp.ne.s32.totalorder %s77, %s80
      %p89 = scmp.eq.s32.totalorder %s23, 2
      %p90 = por %p88, %p89
      %p91 = scmp.ne.s32.totalorder %s80, %s81
      %p92 = scmp.eq.s32.totalorder %s23, 0
      %p93 = por %p91, %p92
      %p94 = scmp.ne.s32.totalorder %s80, %s81
      %p95 = scmp.eq.s32.totalorder %s24, 2
      %p96 = por %p94, %p95
      %p98 = scmp.ne.s32.totalorder %s81, %s97
      %p99 = scmp.eq.s32.totalorder %s24, 0
      %p100 = por %p98, %p99
      %s101 = ssub.s32 %s26, %s40
      %p102 = scmp.eq.s32.totalorder %s101, 0
      %s104 = sadd.s32 %s103, 1
      %s105 = scalar_select %p102, %s103, %s104
      %p108 = pneg %p102
      %p109 = scmp.eq.s32.totalorder %s18, 2
      %p110 = por %p108, %p109
      %p111 = scmp.ne.s32.totalorder %s103, %s106
      %p112 = scmp.eq.s32.totalorder %s18, 0
      %p113 = por %p111, %p112
      %p114 = scmp.ne.s32.totalorder %s103, %s106
      %p115 = scmp.eq.s32.totalorder %s23, 2
      %p116 = por %p114, %p115
      %p117 = scmp.ne.s32.totalorder %s106, %s107
      %p118 = scmp.eq.s32.totalorder %s23, 0
      %p119 = por %p117, %p118
      %p120 = scmp.ne.s32.totalorder %s106, %s107
      %p121 = scmp.eq.s32.totalorder %s24, 2
      %p122 = por %p120, %p121
      %p124 = scmp.ne.s32.totalorder %s107, %s123
      %p125 = scmp.eq.s32.totalorder %s24, 0
      %p126 = por %p124, %p125
      %s127 = ssub.s32 %s26, %s40
      %p128 = scmp.eq.s32.totalorder %s127, 0
      %s130 = sadd.s32 %s129, 1
      %s131 = scalar_select %p128, %s129, %s130
      %p134 = pneg %p128
      %p135 = scmp.eq.s32.totalorder %s18, 2
      %p136 = por %p134, %p135
      %p137 = scmp.ne.s32.totalorder %s129, %s132
      %p138 = scmp.eq.s32.totalorder %s18, 0
      %p139 = por %p137, %p138
      %p140 = scmp.ne.s32.totalorder %s129, %s132
      %p141 = scmp.eq.s32.totalorder %s23, 2
      %p142 = por %p140, %p141
      %p143 = scmp.ne.s32.totalorder %s132, %s133
      %p144 = scmp.eq.s32.totalorder %s23, 0
      %p145 = por %p143, %p144
      %p146 = scmp.ne.s32.totalorder %s132, %s133
      %p147 = scmp.eq.s32.totalorder %s24, 2
      %p148 = por %p146, %p147
      %p150 = scmp.ne.s32.totalorder %s133, %s149
      %p151 = scmp.eq.s32.totalorder %s24, 0
      %p152 = por %p150, %p151
      %s153 = ssub.s32 %s25, %s44
      %s154 = ssub.s32 %s26, %s40
      %s155 = sor.u32 %s153, %s154
      %p156 = scmp.eq.s32.totalorder %s155, 0
      %s158 = sadd.s32 %s157, 1
      %s159 = scalar_select %p156, %s157, %s158
      %p162 = pneg %p156
      %p163 = scmp.eq.s32.totalorder %s18, 2
      %p164 = por %p162, %p163
      %p165 = scmp.ne.s32.totalorder %s157, %s160
      %p166 = scmp.eq.s32.totalorder %s18, 0
      %p167 = por %p165, %p166
      %p168 = scmp.ne.s32.totalorder %s157, %s160
      %p169 = scmp.eq.s32.totalorder %s23, 2
      %p170 = por %p168, %p169
      %p171 = scmp.ne.s32.totalorder %s160, %s161
      %p172 = scmp.eq.s32.totalorder %s23, 0
      %p173 = por %p171, %p172
      %p174 = scmp.ne.s32.totalorder %s160, %s161
      %p175 = scmp.eq.s32.totalorder %s24, 2
      %p176 = por %p174, %p175
      %p178 = scmp.ne.s32.totalorder %s161, %s177
      %p179 = scmp.eq.s32.totalorder %s24, 0
      %p180 = por %p178, %p179
      %s181 = ssub.s32 %s25, %s44
      %s182 = ssub.s32 %s26, %s40
      %s183 = sor.u32 %s181, %s182
      %p184 = scmp.eq.s32.totalorder %s183, 0
      %s186 = sadd.s32 %s185, 1
      %s187 = scalar_select %p184, %s185, %s186
      %p190 = pneg %p184
      %p191 = scmp.eq.s32.totalorder %s18, 2
      %p192 = por %p190, %p191
      %p193 = scmp.ne.s32.totalorder %s185, %s188
      %p194 = scmp.eq.s32.totalorder %s18, 0
      %p195 = por %p193, %p194
      %p196 = scmp.ne.s32.totalorder %s185, %s188
      %p197 = scmp.eq.s32.totalorder %s23, 2
      %p198 = por %p196, %p197
      %p199 = scmp.ne.s32.totalorder %s188, %s189
      %p200 = scmp.eq.s32.totalorder %s23, 0
      %p201 = por %p199, %p200
      %p202 = scmp.ne.s32.totalorder %s188, %s189
      %p203 = scmp.eq.s32.totalorder %s24, 2
      %p204 = por %p202, %p203
      %p206 = scmp.ne.s32.totalorder %s189, %s205
      %p207 = scmp.eq.s32.totalorder %s24, 0
      %p208 = por %p206, %p207
      %p209 = scmp.le.s32.totalorder 1, %s18
      %p210 = scmp.lt.s32.totalorder %s18, 4
      %p211 = pnand %p209, %p210
      %p212 = pneg %p211
      // Predicated region
      $region9: #{tpu_custom_call.1} parent=5 // pred_check
        _
      $region10: #{tpu_custom_call.1} parent=5 // pred_check_branch
        %214 = sbr.rel (%p211) target = $region12
      $region11: #{tpu_custom_call.1} parent=5 // pred_region
        %s215 = ssub.s32 %s18, 1
        // Predicated region
        $region13: #{tpu_custom_call.1} parent=11 // pred_check
          %p216 = pneg %p119
        $region14: #{tpu_custom_call.1} parent=11 // pred_check_branch
          %218 = sbr.rel (%p216) target = $region16
        $region15: #{tpu_custom_call.1} parent=11 // pred_region
          %s219 = smul.u32 2, %s29
          %p220 = scmp.lt.s32.totalorder %s219, 1
          %s221 = scalar_select %p220, %s219, 1
          %s222 = scalar_lea.vmem %s2, %s221
          %s223 = smul.u32 2, %s29
        $region16: #{tpu_custom_call.1} parent=11 // pred_fallthru
          _
        // Predicated region
        $region17: #{tpu_custom_call.1} parent=11 // pred_check
          %p224 = pneg %p145
        $region18: #{tpu_custom_call.1} parent=11 // pred_check_branch
          %226 = sbr.rel (%p224) target = $region20
        $region19: #{tpu_custom_call.1} parent=11 // pred_region
          %s227 = smul.u32 2, %s29
          %p228 = scmp.lt.s32.totalorder %s227, 1
          %s229 = scalar_select %p228, %s227, 1
          %s230 = scalar_lea.vmem %s3, %s229
          %s231 = smul.u32 2, %s29
        $region20: #{tpu_custom_call.1} parent=11 // pred_fallthru
          _
        // Predicated region
        $region21: #{tpu_custom_call.1} parent=11 // pred_check
          %p232 = pneg %p173
        $region22: #{tpu_custom_call.1} parent=11 // pred_check_branch
          %234 = sbr.rel (%p232) target = $region24
        $region23: #{tpu_custom_call.1} parent=11 // pred_region
          %s235 = smul.u32 12, %s28
          %s236 = smul.u32 2, %s29
          %s238 = ssub.s32 1536, 1536
          %239 = vsyncadd [#allocation7], %s238
          %s240 = smul.addr %s235, 2
          %s241 = sadd.s32 %s236, %s240
          %s242 = smul.addr %s241, 64
          %s243 = scalar_lea.hbm %s4, %s242
          %s244 = sshll.u32 [#allocation8], 4
          %s245 = int_to_ptr.vmem [resolvable:$true] %s244
          %250 = dma.hbm_to_vmem [thread:$0]  %s243, 1536, %s245, [#allocation7], 128, 128, 8
        $region24: #{tpu_custom_call.1} parent=11 // pred_fallthru
          _
      $region12: #{tpu_custom_call.1} parent=5 // pred_fallthru
        _
      %p251 = scmp.lt.s32.totalorder %s18, 3
      // Predicated region
      $region25: #{tpu_custom_call.1} parent=5 // pred_check
        %p252 = pneg %p251
      $region26: #{tpu_custom_call.1} parent=5 // pred_check_branch
        %254 = sbr.rel (%p252) target = $region28
      $region27: #{tpu_custom_call.1} parent=5 // pred_region
        // Predicated region
        $region29: #{tpu_custom_call.1} parent=27 // pred_check
          %p255 = pneg %p59
        $region30: #{tpu_custom_call.1} parent=27 // pred_check_branch
          %257 = sbr.rel (%p255) target = $region32
        $region31: #{tpu_custom_call.1} parent=27 // pred_region
          %s258 = sand.u32 %s49, 1
          %s259 = scalar_lea.sflag [#allocation4], %s258
          %s260 = sand.u32 %s49, 1
          %s261 = smul.addr %s260, 144
          %s262 = scalar_lea.vmem [#allocation3], %s261
          %s263 = smul.u32 12, %s25
          %s264 = smul.u32 3, %s27
          %s266 = ssub.s32 2304, 2304
          %267 = vsyncadd %s259, %s266
          %s268 = smul.addr %s263, 9
          %s269 = sadd.s32 %s264, %s268
          %s270 = smul.addr %s269, 64
          %s271 = scalar_lea.hbm %s0, %s270
          %s272 = sshll.u32 %s262, 4
          %s273 = int_to_ptr.vmem [resolvable:$true] %s272
          %278 = dma.hbm_to_vmem [thread:$0]  %s271, 2304, %s273, %s259, 576, 192, 12
        $region32: #{tpu_custom_call.1} parent=27 // pred_fallthru
          _
        // Predicated region
        $region33: #{tpu_custom_call.1} parent=27 // pred_check
          %p279 = pneg %p87
        $region34: #{tpu_custom_call.1} parent=27 // pred_check_branch
          %281 = sbr.rel (%p279) target = $region36
        $region35: #{tpu_custom_call.1} parent=27 // pred_region
          %s282 = sand.u32 %s18, 1
          %s283 = scalar_lea.sflag [#allocation7], %s282
          %s284 = sand.u32 %s77, 1
          %s285 = smul.addr %s284, 384
          %s286 = scalar_lea.vmem [#allocation6], %s285
          %s287 = smul.u32 48, %s27
          %s288 = smul.u32 2, %s26
          %s290 = ssub.s32 6144, 6144
          %291 = vsyncadd %s283, %s290
          %s292 = smul.addr %s287, 2
          %s293 = sadd.s32 %s288, %s292
          %s294 = smul.addr %s293, 64
          %s295 = scalar_lea.hbm %s1, %s294
          %s296 = sshll.u32 %s286, 4
          %s297 = int_to_ptr.vmem [resolvable:$true] %s296
          %302 = dma.hbm_to_vmem [thread:$0]  %s295, 6144, %s297, %s283, 128, 128, 8
        $region36: #{tpu_custom_call.1} parent=27 // pred_fallthru
          _
      $region28: #{tpu_custom_call.1} parent=5 // pred_fallthru
        _
      %p303 = scmp.le.s32.totalorder 1, %s18
      %p304 = scmp.lt.s32.totalorder %s18, 4
      %p305 = pnand %p303, %p304
      %p306 = pneg %p305
      // Predicated region
      $region37: #{tpu_custom_call.1} parent=5 // pred_check
        _
      $region38: #{tpu_custom_call.1} parent=5 // pred_check_branch
        %308 = sbr.rel (%p305) target = $region40
      $region39: #{tpu_custom_call.1} parent=5 // pred_region
        %s309 = ssub.s32 %s18, 1
        %s310 = sand.u32 %s52, 1
        %s311 = scalar_lea.sflag [#allocation4], %s310
        %s312 = sand.u32 %s52, 1
        %s313 = smul.addr %s312, 144
        %s314 = scalar_lea.vmem [#allocation3], %s313
        // Predicated region
        $region41: #{tpu_custom_call.1} parent=39 // pred_check
          %p315 = pneg %p65
        $region42: #{tpu_custom_call.1} parent=39 // pred_check_branch
          %317 = sbr.rel (%p315) target = $region44
        $region43: #{tpu_custom_call.1} parent=39 // pred_region
          %318 = dma.done %s311, 2304
        $region44: #{tpu_custom_call.1} parent=39 // pred_fallthru
          _
        %s319 = sand.u32 %s23, 1
        %s320 = scalar_lea.sflag [#allocation7], %s319
        %s321 = sand.u32 %s80, 1
        %s322 = smul.addr %s321, 384
        %s323 = scalar_lea.vmem [#allocation6], %s322
        // Predicated region
        $region45: #{tpu_custom_call.1} parent=39 // pred_check
          %p324 = pneg %p93
        $region46: #{tpu_custom_call.1} parent=39 // pred_check_branch
          %326 = sbr.rel (%p324) target = $region48
        $region47: #{tpu_custom_call.1} parent=39 // pred_region
          %327 = dma.done %s320, 6144
        $region48: #{tpu_custom_call.1} parent=39 // pred_fallthru
          _
        // Predicated region
        $region49: #{tpu_custom_call.1} parent=39 // pred_check
          %p328 = pneg %p173
        $region50: #{tpu_custom_call.1} parent=39 // pred_check_branch
          %330 = sbr.rel (%p328) target = $region52
        $region51: #{tpu_custom_call.1} parent=39 // pred_region
          %331 = dma.done [#allocation7], 1536
        $region52: #{tpu_custom_call.1} parent=39 // pred_fallthru
          _
        %s332 = sand.u32 %s52, 1
        %s333 = scalar_lea.sflag [#allocation4], %s332
        %s334 = sand.u32 %s52, 1
        %s335 = smul.addr %s334, 144
        %s336 = scalar_lea.vmem [#allocation3], %s335
        %p337 = pneg %p65
        %p338 = pneg %p62
        %s339 = sand.u32 %s23, 1
        %s340 = scalar_lea.sflag [#allocation7], %s339
        %s341 = sand.u32 %s80, 1
        %s342 = smul.addr %s341, 384
        %s343 = scalar_lea.vmem [#allocation6], %s342
        %p344 = pneg %p93
        %p345 = pneg %p90
        %s346 = smul.u32 2, %s29
        %p347 = scmp.lt.s32.totalorder %s346, 1
        %s348 = scalar_select %p347, %s346, 1
        %s349 = scalar_lea.vmem %s2, %s348
        %p350 = pneg %p119
        %p351 = pneg %p116
        %s352 = smul.u32 2, %s29
        %p353 = scmp.lt.s32.totalorder %s352, 1
        %s354 = scalar_select %p353, %s352, 1
        %s355 = scalar_lea.vmem %s3, %s354
        %p356 = pneg %p145
        %p357 = pneg %p142
        %p358 = pneg %p173
        %p359 = pneg %p170
        %p360 = pneg %p201
        %p361 = pneg %p198
        %s362 = smul.u32 12, %s28
        %s363 = smul.u32 3, %s30
        %s364 = smul.u32 48, %s30
        %s365 = smul.u32 2, %s29
        %s366 = smul.u32 2, %s29
        %p367 = scmp.lt.s32.totalorder %s366, 1
        %s368 = scalar_select %p367, %s366, 1
        %s369 = scalar_lea.vmem %s2, %s368
        %s370 = smul.u32 2, %s29
        %s371 = smul.u32 2, %s29
        %p372 = scmp.lt.s32.totalorder %s371, 1
        %s373 = scalar_select %p372, %s371, 1
        %s374 = scalar_lea.vmem %s3, %s373
        %s375 = smul.u32 2, %s29
        %s376 = smul.u32 12, %s28
        %s377 = smul.u32 2, %s29
        %s378 = smul.u32 12, %s28
        %s379 = smul.u32 2, %s29
        %p381 = scmp.eq.s32.totalorder %s30, 0
        // Predicated region
        $region53: #{tpu_custom_call.1} parent=39 // pred_check
          %p382 = pneg %p381
        $region54: #{tpu_custom_call.1} parent=39 // pred_check_branch
          %384 = sbr.rel (%p382) target = $region56
        $region55: #{tpu_custom_call.1} parent=39 // pred_region
          %385 = vst [vmem:[#allocation2] sm:$0xff] 0.0
          %386 = vst [vmem:[#allocation2 + $0x8] sm:$0xff] 0.0
          %387 = vst [vmem:[#allocation2 + $0x10] sm:$0xff] 0.0
          %388 = vst [vmem:[#allocation2 + $0x18] sm:$0xff] 0.0
          %389 = vst [vmem:[#allocation2 + $0x20] sm:$0xff] 0.0
          %390 = vst [vmem:[#allocation2 + $0x28] sm:$0xff] 0.0
          %391 = vst [vmem:[#allocation2 + $0x30] sm:$0xff] 0.0
          %392 = vst [vmem:[#allocation2 + $0x38] sm:$0xff] 0.0
          %393 = vst [vmem:[#allocation2 + $0x40] sm:$0xff] 0.0
          %394 = vst [vmem:[#allocation2 + $0x48] sm:$0xff] 0.0
          %395 = vst [vmem:[#allocation2 + $0x50] sm:$0xff] 0.0
          %396 = vst [vmem:[#allocation2 + $0x58] sm:$0xff] 0.0
          %397 = vst [vmem:[#allocation2 + $0x60] sm:$0xff] 0.0
          %398 = vst [vmem:[#allocation2 + $0x68] sm:$0xff] 0.0
          %399 = vst [vmem:[#allocation2 + $0x70] sm:$0xff] 0.0
          %400 = vst [vmem:[#allocation2 + $0x78] sm:$0xff] 0.0
          %401 = vst [vmem:[#allocation2 + $0x80] sm:$0xff] 0.0
          %402 = vst [vmem:[#allocation2 + $0x88] sm:$0xff] 0.0
          %403 = vst [vmem:[#allocation2 + $0x90] sm:$0xff] 0.0
          %404 = vst [vmem:[#allocation2 + $0x98] sm:$0xff] 0.0
          %405 = vst [vmem:[#allocation2 + $0xa0] sm:$0xff] 0.0
          %406 = vst [vmem:[#allocation2 + $0xa8] sm:$0xff] 0.0
          %407 = vst [vmem:[#allocation2 + $0xb0] sm:$0xff] 0.0
          %408 = vst [vmem:[#allocation2 + $0xb8] sm:$0xff] 0.0
        $region56: #{tpu_custom_call.1} parent=39 // pred_fallthru
          _
        %v409 = vld [vmem:[#allocation2] sm:$0xff]
        %v410 = vld [vmem:[#allocation2 + $0x8] sm:$0xff]
        %v411 = vld [vmem:[#allocation2 + $0x10] sm:$0xff]
        %v412 = vld [vmem:[#allocation2 + $0x18] sm:$0xff]
        %v413 = vld [vmem:[#allocation2 + $0x20] sm:$0xff]
        %v414 = vld [vmem:[#allocation2 + $0x28] sm:$0xff]
        %v415 = vld [vmem:[#allocation2 + $0x30] sm:$0xff]
        %v416 = vld [vmem:[#allocation2 + $0x38] sm:$0xff]
        %v417 = vld [vmem:[#allocation2 + $0x40] sm:$0xff]
        %v418 = vld [vmem:[#allocation2 + $0x48] sm:$0xff]
        %v419 = vld [vmem:[#allocation2 + $0x50] sm:$0xff]
        %v420 = vld [vmem:[#allocation2 + $0x58] sm:$0xff]
        %v421 = vld [vmem:[#allocation2 + $0x60] sm:$0xff]
        %v422 = vld [vmem:[#allocation2 + $0x68] sm:$0xff]
        %v423 = vld [vmem:[#allocation2 + $0x70] sm:$0xff]
        %v424 = vld [vmem:[#allocation2 + $0x78] sm:$0xff]
        %v425 = vld [vmem:[#allocation2 + $0x80] sm:$0xff]
        %v426 = vld [vmem:[#allocation2 + $0x88] sm:$0xff]
        %v427 = vld [vmem:[#allocation2 + $0x90] sm:$0xff]
        %v428 = vld [vmem:[#allocation2 + $0x98] sm:$0xff]
        %v429 = vld [vmem:[#allocation2 + $0xa0] sm:$0xff]
        %v430 = vld [vmem:[#allocation2 + $0xa8] sm:$0xff]
        %v431 = vld [vmem:[#allocation2 + $0xb0] sm:$0xff]
        %v432 = vld [vmem:[#allocation2 + $0xb8] sm:$0xff]
        %v433 = vld [vmem:[%s314] sm:$0xff]
        %v434 = vld [vmem:[%s314 + $0x8] sm:$0xf]
        %v435 = vld [vmem:[%s314 + $0xc] sm:$0xff]
        %v436 = vld [vmem:[%s314 + $0x14] sm:$0xf]
        %v437 = vld [vmem:[%s314 + $0x18] sm:$0xff]
        %v438 = vld [vmem:[%s314 + $0x20] sm:$0xf]
        %v439 = vld [vmem:[%s314 + $0x24] sm:$0xff]
        %v440 = vld [vmem:[%s314 + $0x2c] sm:$0xf]
        %v441 = vld [vmem:[%s314 + $0x30] sm:$0xff]
        %v442 = vld [vmem:[%s314 + $0x38] sm:$0xf]
        %v443 = vld [vmem:[%s314 + $0x3c] sm:$0xff]
        %v444 = vld [vmem:[%s314 + $0x44] sm:$0xf]
        %v445 = vld [vmem:[%s314 + $0x48] sm:$0xff]
        %v446 = vld [vmem:[%s314 + $0x50] sm:$0xf]
        %v447 = vld [vmem:[%s314 + $0x54] sm:$0xff]
        %v448 = vld [vmem:[%s314 + $0x5c] sm:$0xf]
        %v449 = vld [vmem:[%s314 + $0x60] sm:$0xff]
        %v450 = vld [vmem:[%s314 + $0x68] sm:$0xf]
        %v451 = vld [vmem:[%s314 + $0x6c] sm:$0xff]
        %v452 = vld [vmem:[%s314 + $0x74] sm:$0xf]
        %v453 = vld [vmem:[%s314 + $0x78] sm:$0xff]
        %v454 = vld [vmem:[%s314 + $0x80] sm:$0xf]
        %v455 = vld [vmem:[%s314 + $0x84] sm:$0xff]
        %v456 = vld [vmem:[%s314 + $0x8c] sm:$0xf]
        %v457 = vld [vmem:[%s323] sm:$0xff]
        %v458 = vld [vmem:[%s323 + $0x8] sm:$0xff]
        %v459 = vld [vmem:[%s323 + $0x10] sm:$0xff]
        %v460 = vld [vmem:[%s323 + $0x18] sm:$0xff]
        %v461 = vld [vmem:[%s323 + $0x20] sm:$0xff]
        %v462 = vld [vmem:[%s323 + $0x28] sm:$0xff]
        %v463 = vld [vmem:[%s323 + $0x30] sm:$0xff]
        %v464 = vld [vmem:[%s323 + $0x38] sm:$0xff]
        %v465 = vld [vmem:[%s323 + $0x40] sm:$0xff]
        %v466 = vld [vmem:[%s323 + $0x48] sm:$0xff]
        %v467 = vld [vmem:[%s323 + $0x50] sm:$0xff]
        %v468 = vld [vmem:[%s323 + $0x58] sm:$0xff]
        %v469 = vld [vmem:[%s323 + $0x60] sm:$0xff]
        %v470 = vld [vmem:[%s323 + $0x68] sm:$0xff]
        %v471 = vld [vmem:[%s323 + $0x70] sm:$0xff]
        %v472 = vld [vmem:[%s323 + $0x78] sm:$0xff]
        %v473 = vld [vmem:[%s323 + $0x80] sm:$0xff]
        %v474 = vld [vmem:[%s323 + $0x88] sm:$0xff]
        %v475 = vld [vmem:[%s323 + $0x90] sm:$0xff]
        %v476 = vld [vmem:[%s323 + $0x98] sm:$0xff]
        %v477 = vld [vmem:[%s323 + $0xa0] sm:$0xff]
        %v478 = vld [vmem:[%s323 + $0xa8] sm:$0xff]
        %v479 = vld [vmem:[%s323 + $0xb0] sm:$0xff]
        %v480 = vld [vmem:[%s323 + $0xb8] sm:$0xff]
        %v481 = vld [vmem:[%s323 + $0xc0] sm:$0xff]
        %v482 = vld [vmem:[%s323 + $0xc8] sm:$0xff]
        %v483 = vld [vmem:[%s323 + $0xd0] sm:$0xff]
        %v484 = vld [vmem:[%s323 + $0xd8] sm:$0xff]
        %v485 = vld [vmem:[%s323 + $0xe0] sm:$0xff]
        %v486 = vld [vmem:[%s323 + $0xe8] sm:$0xff]
        %v487 = vld [vmem:[%s323 + $0xf0] sm:$0xff]
        %v488 = vld [vmem:[%s323 + $0xf8] sm:$0xff]
        %v489 = vld [vmem:[%s323 + $0x100] sm:$0xff]
        %v490 = vld [vmem:[%s323 + $0x108] sm:$0xff]
        %v491 = vld [vmem:[%s323 + $0x110] sm:$0xff]
        %v492 = vld [vmem:[%s323 + $0x118] sm:$0xff]
        %v493 = vld [vmem:[%s323 + $0x120] sm:$0xff]
        %v494 = vld [vmem:[%s323 + $0x128] sm:$0xff]
        %v495 = vld [vmem:[%s323 + $0x130] sm:$0xff]
        %v496 = vld [vmem:[%s323 + $0x138] sm:$0xff]
        %v497 = vld [vmem:[%s323 + $0x140] sm:$0xff]
        %v498 = vld [vmem:[%s323 + $0x148] sm:$0xff]
        %v499 = vld [vmem:[%s323 + $0x150] sm:$0xff]
        %v500 = vld [vmem:[%s323 + $0x158] sm:$0xff]
        %v501 = vld [vmem:[%s323 + $0x160] sm:$0xff]
        %v502 = vld [vmem:[%s323 + $0x168] sm:$0xff]
        %v503 = vld [vmem:[%s323 + $0x170] sm:$0xff]
        %v504 = vld [vmem:[%s323 + $0x178] sm:$0xff]
        %v529 = vunpack.c.l.b16 %v433
        %v530 = vunpack.c.h.b16 %v433
        %v531 = vunpack.c.l.b16 %v434
        %v532 = vunpack.c.l.b16 %v435
        %v533 = vunpack.c.h.b16 %v435
        %v534 = vunpack.c.l.b16 %v436
        %v535 = vunpack.c.l.b16 %v437
        %v536 = vunpack.c.h.b16 %v437
        %v537 = vunpack.c.l.b16 %v438
        %v538 = vunpack.c.l.b16 %v439
        %v539 = vunpack.c.h.b16 %v439
        %v540 = vunpack.c.l.b16 %v440
        %v541 = vunpack.c.l.b16 %v441
        %v542 = vunpack.c.h.b16 %v441
        %v543 = vunpack.c.l.b16 %v442
        %v544 = vunpack.c.l.b16 %v443
        %v545 = vunpack.c.h.b16 %v443
        %v546 = vunpack.c.l.b16 %v444
        %v547 = vunpack.c.l.b16 %v445
        %v548 = vunpack.c.h.b16 %v445
        %v549 = vunpack.c.l.b16 %v446
        %v550 = vunpack.c.l.b16 %v447
        %v551 = vunpack.c.h.b16 %v447
        %v552 = vunpack.c.l.b16 %v448
        %v553 = vunpack.c.l.b16 %v449
        %v554 = vunpack.c.h.b16 %v449
        %v555 = vunpack.c.l.b16 %v450
        %v556 = vunpack.c.l.b16 %v451
        %v557 = vunpack.c.h.b16 %v451
        %v558 = vunpack.c.l.b16 %v452
        %v559 = vunpack.c.l.b16 %v453
        %v560 = vunpack.c.h.b16 %v453
        %v561 = vunpack.c.l.b16 %v454
        %v562 = vunpack.c.l.b16 %v455
        %v563 = vunpack.c.h.b16 %v455
        %v564 = vunpack.c.l.b16 %v456
        %v565 = vpack.c.b16 %v532, %v529
        %v566 = vpack.c.b16 %v533, %v530
        %v567 = vpack.c.b16 %v534, %v531
        %v568 = vpack.c.b16 %v538, %v535
        %v569 = vpack.c.b16 %v539, %v536
        %v570 = vpack.c.b16 %v540, %v537
        %v571 = vpack.c.b16 %v544, %v541
        %v572 = vpack.c.b16 %v545, %v542
        %v573 = vpack.c.b16 %v546, %v543
        %v574 = vpack.c.b16 %v550, %v547
        %v575 = vpack.c.b16 %v551, %v548
        %v576 = vpack.c.b16 %v552, %v549
        %v577 = vpack.c.b16 %v556, %v553
        %v578 = vpack.c.b16 %v557, %v554
        %v579 = vpack.c.b16 %v558, %v555
        %v580 = vpack.c.b16 %v562, %v559
        %v581 = vpack.c.b16 %v563, %v560
        %v582 = vpack.c.b16 %v564, %v561
        %v649 = vunpack.c.l.b16 %v457
        %v650 = vunpack.c.h.b16 %v457
        %v651 = vunpack.c.l.b16 %v458
        %v652 = vunpack.c.h.b16 %v458
        %v653 = vunpack.c.l.b16 %v459
        %v654 = vunpack.c.h.b16 %v459
        %v655 = vunpack.c.l.b16 %v460
        %v656 = vunpack.c.h.b16 %v460
        %v657 = vunpack.c.l.b16 %v461
        %v658 = vunpack.c.h.b16 %v461
        %v659 = vunpack.c.l.b16 %v462
        %v660 = vunpack.c.h.b16 %v462
        %v661 = vunpack.c.l.b16 %v463
        %v662 = vunpack.c.h.b16 %v463
        %v663 = vunpack.c.l.b16 %v464
        %v664 = vunpack.c.h.b16 %v464
        %v665 = vunpack.c.l.b16 %v465
        %v666 = vunpack.c.h.b16 %v465
        %v667 = vunpack.c.l.b16 %v466
        %v668 = vunpack.c.h.b16 %v466
        %v669 = vunpack.c.l.b16 %v467
        %v670 = vunpack.c.h.b16 %v467
        %v671 = vunpack.c.l.b16 %v468
        %v672 = vunpack.c.h.b16 %v468
        %v673 = vunpack.c.l.b16 %v469
        %v674 = vunpack.c.h.b16 %v469
        %v675 = vunpack.c.l.b16 %v470
        %v676 = vunpack.c.h.b16 %v470
        %v677 = vunpack.c.l.b16 %v471
        %v678 = vunpack.c.h.b16 %v471
        %v679 = vunpack.c.l.b16 %v472
        %v680 = vunpack.c.h.b16 %v472
        %v681 = vunpack.c.l.b16 %v473
        %v682 = vunpack.c.h.b16 %v473
        %v683 = vunpack.c.l.b16 %v474
        %v684 = vunpack.c.h.b16 %v474
        %v685 = vunpack.c.l.b16 %v475
        %v686 = vunpack.c.h.b16 %v475
        %v687 = vunpack.c.l.b16 %v476
        %v688 = vunpack.c.h.b16 %v476
        %v689 = vunpack.c.l.b16 %v477
        %v690 = vunpack.c.h.b16 %v477
        %v691 = vunpack.c.l.b16 %v478
        %v692 = vunpack.c.h.b16 %v478
        %v693 = vunpack.c.l.b16 %v479
        %v694 = vunpack.c.h.b16 %v479
        %v695 = vunpack.c.l.b16 %v480
        %v696 = vunpack.c.h.b16 %v480
        %v697 = vunpack.c.l.b16 %v481
        %v698 = vunpack.c.h.b16 %v481
        %v699 = vunpack.c.l.b16 %v482
        %v700 = vunpack.c.h.b16 %v482
        %v701 = vunpack.c.l.b16 %v483
        %v702 = vunpack.c.h.b16 %v483
        %v703 = vunpack.c.l.b16 %v484
        %v704 = vunpack.c.h.b16 %v484
        %v705 = vunpack.c.l.b16 %v485
        %v706 = vunpack.c.h.b16 %v485
        %v707 = vunpack.c.l.b16 %v486
        %v708 = vunpack.c.h.b16 %v486
        %v709 = vunpack.c.l.b16 %v487
        %v710 = vunpack.c.h.b16 %v487
        %v711 = vunpack.c.l.b16 %v488
        %v712 = vunpack.c.h.b16 %v488
        %v713 = vunpack.c.l.b16 %v489
        %v714 = vunpack.c.h.b16 %v489
        %v715 = vunpack.c.l.b16 %v490
        %v716 = vunpack.c.h.b16 %v490
        %v717 = vunpack.c.l.b16 %v491
        %v718 = vunpack.c.h.b16 %v491
        %v719 = vunpack.c.l.b16 %v492
        %v720 = vunpack.c.h.b16 %v492
        %v721 = vunpack.c.l.b16 %v493
        %v722 = vunpack.c.h.b16 %v493
        %v723 = vunpack.c.l.b16 %v494
        %v724 = vunpack.c.h.b16 %v494
        %v725 = vunpack.c.l.b16 %v495
        %v726 = vunpack.c.h.b16 %v495
        %v727 = vunpack.c.l.b16 %v496
        %v728 = vunpack.c.h.b16 %v496
        %v729 = vunpack.c.l.b16 %v497
        %v730 = vunpack.c.h.b16 %v497
        %v731 = vunpack.c.l.b16 %v498
        %v732 = vunpack.c.h.b16 %v498
        %v733 = vunpack.c.l.b16 %v499
        %v734 = vunpack.c.h.b16 %v499
        %v735 = vunpack.c.l.b16 %v500
        %v736 = vunpack.c.h.b16 %v500
        %v737 = vunpack.c.l.b16 %v501
        %v738 = vunpack.c.h.b16 %v501
        %v739 = vunpack.c.l.b16 %v502
        %v740 = vunpack.c.h.b16 %v502
        %v741 = vunpack.c.l.b16 %v503
        %v742 = vunpack.c.h.b16 %v503
        %v743 = vunpack.c.l.b16 %v504
        %v744 = vunpack.c.h.b16 %v504
        %v745 = vpack.c.b16 %v651, %v649
        %v746 = vpack.c.b16 %v652, %v650
        %v747 = vpack.c.b16 %v655, %v653
        %v748 = vpack.c.b16 %v656, %v654
        %v749 = vpack.c.b16 %v659, %v657
        %v750 = vpack.c.b16 %v660, %v658
        %v751 = vpack.c.b16 %v663, %v661
        %v752 = vpack.c.b16 %v664, %v662
        %v753 = vpack.c.b16 %v667, %v665
        %v754 = vpack.c.b16 %v668, %v666
        %v755 = vpack.c.b16 %v671, %v669
        %v756 = vpack.c.b16 %v672, %v670
        %v757 = vpack.c.b16 %v675, %v673
        %v758 = vpack.c.b16 %v676, %v674
        %v759 = vpack.c.b16 %v679, %v677
        %v760 = vpack.c.b16 %v680, %v678
        %v761 = vpack.c.b16 %v683, %v681
        %v762 = vpack.c.b16 %v684, %v682
        %v763 = vpack.c.b16 %v687, %v685
        %v764 = vpack.c.b16 %v688, %v686
        %v765 = vpack.c.b16 %v691, %v689
        %v766 = vpack.c.b16 %v692, %v690
        %v767 = vpack.c.b16 %v695, %v693
        %v768 = vpack.c.b16 %v696, %v694
        %v769 = vpack.c.b16 %v699, %v697
        %v770 = vpack.c.b16 %v700, %v698
        %v771 = vpack.c.b16 %v703, %v701
        %v772 = vpack.c.b16 %v704, %v702
        %v773 = vpack.c.b16 %v707, %v705
        %v774 = vpack.c.b16 %v708, %v706
        %v775 = vpack.c.b16 %v711, %v709
        %v776 = vpack.c.b16 %v712, %v710
        %v777 = vpack.c.b16 %v715, %v713
        %v778 = vpack.c.b16 %v716, %v714
        %v779 = vpack.c.b16 %v719, %v717
        %v780 = vpack.c.b16 %v720, %v718
        %v781 = vpack.c.b16 %v723, %v721
        %v782 = vpack.c.b16 %v724, %v722
        %v783 = vpack.c.b16 %v727, %v725
        %v784 = vpack.c.b16 %v728, %v726
        %v785 = vpack.c.b16 %v731, %v729
        %v786 = vpack.c.b16 %v732, %v730
        %v787 = vpack.c.b16 %v735, %v733
        %v788 = vpack.c.b16 %v736, %v734
        %v789 = vpack.c.b16 %v739, %v737
        %v790 = vpack.c.b16 %v740, %v738
        %v791 = vpack.c.b16 %v743, %v741
        %v792 = vpack.c.b16 %v744, %v742
        %841 = vmatprep.subr.bf16.mxu0 %v760
        %842 = vmatpush1.bf16.msra.mxu0 %v759
        %843 = vmatprep.subr.bf16.mxu0 %v758
        %844 = vmatpush1.bf16.msra.mxu0 %v757
        %845 = vmatprep.subr.bf16.mxu0 %v756
        %846 = vmatpush1.bf16.msra.mxu0 %v755
        %847 = vmatprep.subr.bf16.mxu0 %v754
        %848 = vmatpush1.bf16.msra.mxu0 %v753
        %849 = vmatprep.subr.bf16.mxu0 %v752
        %850 = vmatpush1.bf16.msra.mxu0 %v751
        %851 = vmatprep.subr.bf16.mxu0 %v750
        %852 = vmatpush1.bf16.msra.mxu0 %v749
        %853 = vmatprep.subr.bf16.mxu0 %v748
        %854 = vmatpush1.bf16.msra.mxu0 %v747
        %855 = vmatprep.subr.bf16.mxu0 %v746
        %856 = vmatpush1.bf16.msra.mxu0 %v745
        %857 = vmatprep.subr.bf16.mxu0 %v776
        %858 = vmatpush2.bf16.msra.mxu0 %v775
        %859 = vmatprep.subr.bf16.mxu0 %v774
        %860 = vmatpush2.bf16.msra.mxu0 %v773
        %861 = vmatprep.subr.bf16.mxu0 %v772
        %862 = vmatpush2.bf16.msra.mxu0 %v771
        %863 = vmatprep.subr.bf16.mxu0 %v770
        %864 = vmatpush2.bf16.msra.mxu0 %v769
        %865 = vmatprep.subr.bf16.mxu0 %v768
        %866 = vmatpush2.bf16.msra.mxu0 %v767
        %867 = vmatprep.subr.bf16.mxu0 %v766
        %868 = vmatpush2.bf16.msra.mxu0 %v765
        %869 = vmatprep.subr.bf16.mxu0 %v764
        %870 = vmatpush2.bf16.msra.mxu0 %v763
        %871 = vmatprep.subr.bf16.mxu0 %v762
        %872 = vmatpush2.bf16.msra.mxu0 %v761
        %873 = vmatprep.mubr.bf16.mxu0 %v566
        %874 = vmatmul.mubr.bf16.gmra.mxu0 %v565
        %v875 = vpop.f32.mrf.mxu0
        %v876 = vadd.f32 0.0, %v875
        %v877 = vpop.f32.mrf.mxu0
        %v878 = vadd.f32 0.0, %v877
        %v879 = vpop.f32.mrf.mxu0
        %v880 = vadd.f32 0.0, %v879
        %v881 = vpop.f32.mrf.mxu0
        %v882 = vadd.f32 0.0, %v881
        %883 = vmatprep.mubr.bf16.mxu0 %v569
        %884 = vmatmul.mubr.bf16.gmra.mxu0 %v568
        %v885 = vpop.f32.mrf.mxu0
        %v886 = vadd.f32 0.0, %v885
        %v887 = vpop.f32.mrf.mxu0
        %v888 = vadd.f32 0.0, %v887
        %v889 = vpop.f32.mrf.mxu0
        %v890 = vadd.f32 0.0, %v889
        %v891 = vpop.f32.mrf.mxu0
        %v892 = vadd.f32 0.0, %v891
        %893 = vmatprep.mubr.bf16.mxu0 %v572
        %894 = vmatmul.mubr.bf16.gmra.mxu0 %v571
        %v895 = vpop.f32.mrf.mxu0
        %v896 = vadd.f32 0.0, %v895
        %v897 = vpop.f32.mrf.mxu0
        %v898 = vadd.f32 0.0, %v897
        %v899 = vpop.f32.mrf.mxu0
        %v900 = vadd.f32 0.0, %v899
        %v901 = vpop.f32.mrf.mxu0
        %v902 = vadd.f32 0.0, %v901
        %903 = vmatprep.mubr.bf16.mxu0 %v575
        %904 = vmatmul.mubr.bf16.gmra.mxu0 %v574
        %v905 = vpop.f32.mrf.mxu0
        %v906 = vadd.f32 0.0, %v905
        %v907 = vpop.f32.mrf.mxu0
        %v908 = vadd.f32 0.0, %v907
        %v909 = vpop.f32.mrf.mxu0
        %v910 = vadd.f32 0.0, %v909
        %v911 = vpop.f32.mrf.mxu0
        %v912 = vadd.f32 0.0, %v911
        %913 = vmatprep.mubr.bf16.mxu0 %v578
        %914 = vmatmul.mubr.bf16.gmra.mxu0 %v577
        %v915 = vpop.f32.mrf.mxu0
        %v916 = vadd.f32 0.0, %v915
        %v917 = vpop.f32.mrf.mxu0
        %v918 = vadd.f32 0.0, %v917
        %v919 = vpop.f32.mrf.mxu0
        %v920 = vadd.f32 0.0, %v919
        %v921 = vpop.f32.mrf.mxu0
        %v922 = vadd.f32 0.0, %v921
        %923 = vmatprep.mubr.bf16.mxu0 %v581
        %924 = vmatmul.mubr.bf16.gmra.mxu0 %v580
        %v925 = vpop.f32.mrf.mxu0
        %v926 = vadd.f32 0.0, %v925
        %v927 = vpop.f32.mrf.mxu0
        %v928 = vadd.f32 0.0, %v927
        %v929 = vpop.f32.mrf.mxu0
        %v930 = vadd.f32 0.0, %v929
        %v931 = vpop.f32.mrf.mxu0
        %v932 = vadd.f32 0.0, %v931
        %933 = vdwg.mxu0
        %934 = vmatprep.subr.bf16.mxu0 %v792
        %935 = vmatpush1.bf16.msra.mxu0 %v791
        %936 = vmatprep.subr.bf16.mxu0 %v790
        %937 = vmatpush1.bf16.msra.mxu0 %v789
        %938 = vmatprep.subr.bf16.mxu0 %v788
        %939 = vmatpush1.bf16.msra.mxu0 %v787
        %940 = vmatprep.subr.bf16.mxu0 %v786
        %941 = vmatpush1.bf16.msra.mxu0 %v785
        %942 = vmatprep.subr.bf16.mxu0 %v784
        %943 = vmatpush1.bf16.msra.mxu0 %v783
        %944 = vmatprep.subr.bf16.mxu0 %v782
        %945 = vmatpush1.bf16.msra.mxu0 %v781
        %946 = vmatprep.subr.bf16.mxu0 %v780
        %947 = vmatpush1.bf16.msra.mxu0 %v779
        %948 = vmatprep.subr.bf16.mxu0 %v778
        %949 = vmatpush1.bf16.msra.mxu0 %v777
        %950 = vmatprep.subr.bf16.mxu0 0
        %951 = vmatpush2.bf16.msra.mxu0 0
        %952 = vmatprep.subr.bf16.mxu0 0
        %953 = vmatpush2.bf16.msra.mxu0 0
        %954 = vmatprep.subr.bf16.mxu0 0
        %955 = vmatpush2.bf16.msra.mxu0 0
        %956 = vmatprep.subr.bf16.mxu0 0
        %957 = vmatpush2.bf16.msra.mxu0 0
        %958 = vmatprep.subr.bf16.mxu0 0
        %959 = vmatpush2.bf16.msra.mxu0 0
        %960 = vmatprep.subr.bf16.mxu0 0
        %961 = vmatpush2.bf16.msra.mxu0 0
        %962 = vmatprep.subr.bf16.mxu0 0
        %963 = vmatpush2.bf16.msra.mxu0 0
        %964 = vmatprep.subr.bf16.mxu0 0
        %965 = vmatpush2.bf16.msra.mxu0 0
        %966 = vmatprep.mubr.bf16.mxu0 0
        %967 = vmatmul.mubr.bf16.gmra.mxu0 %v567
        %v968 = vpop.f32.mrf.mxu0
        %v969 = vadd.f32 %v876, %v968
        %v970 = vpop.f32.mrf.mxu0
        %v971 = vadd.f32 %v878, %v970
        %v972 = vpop.f32.mrf.mxu0
        %v973 = vadd.f32 %v880, %v972
        %v974 = vpop.f32.mrf.mxu0
        %v975 = vadd.f32 %v882, %v974
        %976 = vmatprep.mubr.bf16.mxu0 0
        %977 = vmatmul.mubr.bf16.gmra.mxu0 %v570
        %v978 = vpop.f32.mrf.mxu0
        %v979 = vadd.f32 %v886, %v978
        %v980 = vpop.f32.mrf.mxu0
        %v981 = vadd.f32 %v888, %v980
        %v982 = vpop.f32.mrf.mxu0
        %v983 = vadd.f32 %v890, %v982
        %v984 = vpop.f32.mrf.mxu0
        %v985 = vadd.f32 %v892, %v984
        %986 = vmatprep.mubr.bf16.mxu0 0
        %987 = vmatmul.mubr.bf16.gmra.mxu0 %v573
        %v988 = vpop.f32.mrf.mxu0
        %v989 = vadd.f32 %v896, %v988
        %v990 = vpop.f32.mrf.mxu0
        %v991 = vadd.f32 %v898, %v990
        %v992 = vpop.f32.mrf.mxu0
        %v993 = vadd.f32 %v900, %v992
        %v994 = vpop.f32.mrf.mxu0
        %v995 = vadd.f32 %v902, %v994
        %996 = vmatprep.mubr.bf16.mxu0 0
        %997 = vmatmul.mubr.bf16.gmra.mxu0 %v576
        %v998 = vpop.f32.mrf.mxu0
        %v999 = vadd.f32 %v906, %v998
        %v1000 = vpop.f32.mrf.mxu0
        %v1001 = vadd.f32 %v908, %v1000
        %v1002 = vpop.f32.mrf.mxu0
        %v1003 = vadd.f32 %v910, %v1002
        %v1004 = vpop.f32.mrf.mxu0
        %v1005 = vadd.f32 %v912, %v1004
        %1006 = vmatprep.mubr.bf16.mxu0 0
        %1007 = vmatmul.mubr.bf16.gmra.mxu0 %v579
        %v1008 = vpop.f32.mrf.mxu0
        %v1009 = vadd.f32 %v916, %v1008
        %v1010 = vpop.f32.mrf.mxu0
        %v1011 = vadd.f32 %v918, %v1010
        %v1012 = vpop.f32.mrf.mxu0
        %v1013 = vadd.f32 %v920, %v1012
        %v1014 = vpop.f32.mrf.mxu0
        %v1015 = vadd.f32 %v922, %v1014
        %1016 = vmatprep.mubr.bf16.mxu0 0
        %1017 = vmatmul.mubr.bf16.gmra.mxu0 %v582
        %v1018 = vpop.f32.mrf.mxu0
        %v1019 = vadd.f32 %v926, %v1018
        %v1020 = vpop.f32.mrf.mxu0
        %v1021 = vadd.f32 %v928, %v1020
        %v1022 = vpop.f32.mrf.mxu0
        %v1023 = vadd.f32 %v930, %v1022
        %v1024 = vpop.f32.mrf.mxu0
        %v1025 = vadd.f32 %v932, %v1024
        %1026 = vdwg.mxu0
        %v1027 = vadd.f32 %v409, %v969
        %v1028 = vadd.f32 %v410, %v971
        %v1029 = vadd.f32 %v411, %v973
        %v1030 = vadd.f32 %v412, %v975
        %v1031 = vadd.f32 %v413, %v979
        %v1032 = vadd.f32 %v414, %v981
        %v1033 = vadd.f32 %v415, %v983
        %v1034 = vadd.f32 %v416, %v985
        %v1035 = vadd.f32 %v417, %v989
        %v1036 = vadd.f32 %v418, %v991
        %v1037 = vadd.f32 %v419, %v993
        %v1038 = vadd.f32 %v420, %v995
        %v1039 = vadd.f32 %v421, %v999
        %v1040 = vadd.f32 %v422, %v1001
        %v1041 = vadd.f32 %v423, %v1003
        %v1042 = vadd.f32 %v424, %v1005
        %v1043 = vadd.f32 %v425, %v1009
        %v1044 = vadd.f32 %v426, %v1011
        %v1045 = vadd.f32 %v427, %v1013
        %v1046 = vadd.f32 %v428, %v1015
        %v1047 = vadd.f32 %v429, %v1019
        %v1048 = vadd.f32 %v430, %v1021
        %v1049 = vadd.f32 %v431, %v1023
        %v1050 = vadd.f32 %v432, %v1025
        %1051 = vst [vmem:[#allocation2] sm:$0xff] %v1027
        %1052 = vst [vmem:[#allocation2 + $0x8] sm:$0xff] %v1028
        %1053 = vst [vmem:[#allocation2 + $0x10] sm:$0xff] %v1029
        %1054 = vst [vmem:[#allocation2 + $0x18] sm:$0xff] %v1030
        %1055 = vst [vmem:[#allocation2 + $0x20] sm:$0xff] %v1031
        %1056 = vst [vmem:[#allocation2 + $0x28] sm:$0xff] %v1032
        %1057 = vst [vmem:[#allocation2 + $0x30] sm:$0xff] %v1033
        %1058 = vst [vmem:[#allocation2 + $0x38] sm:$0xff] %v1034
        %1059 = vst [vmem:[#allocation2 + $0x40] sm:$0xff] %v1035
        %1060 = vst [vmem:[#allocation2 + $0x48] sm:$0xff] %v1036
        %1061 = vst [vmem:[#allocation2 + $0x50] sm:$0xff] %v1037
        %1062 = vst [vmem:[#allocation2 + $0x58] sm:$0xff] %v1038
        %1063 = vst [vmem:[#allocation2 + $0x60] sm:$0xff] %v1039
        %1064 = vst [vmem:[#allocation2 + $0x68] sm:$0xff] %v1040
        %1065 = vst [vmem:[#allocation2 + $0x70] sm:$0xff] %v1041
        %1066 = vst [vmem:[#allocation2 + $0x78] sm:$0xff] %v1042
        %1067 = vst [vmem:[#allocation2 + $0x80] sm:$0xff] %v1043
        %1068 = vst [vmem:[#allocation2 + $0x88] sm:$0xff] %v1044
        %1069 = vst [vmem:[#allocation2 + $0x90] sm:$0xff] %v1045
        %1070 = vst [vmem:[#allocation2 + $0x98] sm:$0xff] %v1046
        %1071 = vst [vmem:[#allocation2 + $0xa0] sm:$0xff] %v1047
        %1072 = vst [vmem:[#allocation2 + $0xa8] sm:$0xff] %v1048
        %1073 = vst [vmem:[#allocation2 + $0xb0] sm:$0xff] %v1049
        %1074 = vst [vmem:[#allocation2 + $0xb8] sm:$0xff] %v1050
        %p1075 = scmp.eq.s32.totalorder %s30, 2
        // Predicated region
        $region57: #{tpu_custom_call.1} parent=39 // pred_check
          %p1076 = pneg %p1075
        $region58: #{tpu_custom_call.1} parent=39 // pred_check_branch
          %1078 = sbr.rel (%p1076) target = $region60
        $region59: #{tpu_custom_call.1} parent=39 // pred_region
          %v1079 = vld [vmem:[#allocation2] sm:$0xff]
          %v1080 = vld [vmem:[#allocation2 + $0x8] sm:$0xff]
          %v1081 = vld [vmem:[#allocation2 + $0x10] sm:$0xff]
          %v1082 = vld [vmem:[#allocation2 + $0x18] sm:$0xff]
          %v1083 = vld [vmem:[#allocation2 + $0x20] sm:$0xff]
          %v1084 = vld [vmem:[#allocation2 + $0x28] sm:$0xff]
          %v1085 = vld [vmem:[#allocation2 + $0x30] sm:$0xff]
          %v1086 = vld [vmem:[#allocation2 + $0x38] sm:$0xff]
          %v1087 = vld [vmem:[#allocation2 + $0x40] sm:$0xff]
          %v1088 = vld [vmem:[#allocation2 + $0x48] sm:$0xff]
          %v1089 = vld [vmem:[#allocation2 + $0x50] sm:$0xff]
          %v1090 = vld [vmem:[#allocation2 + $0x58] sm:$0xff]
          %v1091 = vld [vmem:[#allocation2 + $0x60] sm:$0xff]
          %v1092 = vld [vmem:[#allocation2 + $0x68] sm:$0xff]
          %v1093 = vld [vmem:[#allocation2 + $0x70] sm:$0xff]
          %v1094 = vld [vmem:[#allocation2 + $0x78] sm:$0xff]
          %v1095 = vld [vmem:[#allocation2 + $0x80] sm:$0xff]
          %v1096 = vld [vmem:[#allocation2 + $0x88] sm:$0xff]
          %v1097 = vld [vmem:[#allocation2 + $0x90] sm:$0xff]
          %v1098 = vld [vmem:[#allocation2 + $0x98] sm:$0xff]
          %v1099 = vld [vmem:[#allocation2 + $0xa0] sm:$0xff]
          %v1100 = vld [vmem:[#allocation2 + $0xa8] sm:$0xff]
          %v1101 = vld [vmem:[#allocation2 + $0xb0] sm:$0xff]
          %v1102 = vld [vmem:[#allocation2 + $0xb8] sm:$0xff]
          %v1103 = vld [vmem:[%s369] sm:$0x3]
          %v1104 = vld [vmem:[%s374] sm:$0x3]
          %v1105 = vld [vmem:[#allocation8] sm:$0xff]
          %v1106 = vld [vmem:[#allocation8 + $0x8] sm:$0xff]
          %v1107 = vld [vmem:[#allocation8 + $0x10] sm:$0xff]
          %v1108 = vld [vmem:[#allocation8 + $0x18] sm:$0xff]
          %v1109 = vld [vmem:[#allocation8 + $0x20] sm:$0xff]
          %v1110 = vld [vmem:[#allocation8 + $0x28] sm:$0xff]
          %v1111 = vld [vmem:[#allocation8 + $0x30] sm:$0xff]
          %v1112 = vld [vmem:[#allocation8 + $0x38] sm:$0xff]
          %v1113 = vld [vmem:[#allocation8 + $0x40] sm:$0xff]
          %v1114 = vld [vmem:[#allocation8 + $0x48] sm:$0xff]
          %v1115 = vld [vmem:[#allocation8 + $0x50] sm:$0xff]
          %v1116 = vld [vmem:[#allocation8 + $0x58] sm:$0xff]
          %v1118 = vlaneseq
          %v1119 = vshrl.u32 %v1118, 7
          %v1120 = vsub.s32 0, %v1119
          %v1121 = vrot.slane %v1103, %v1120
          %v1122 = vlaneseq
          %v1123 = vshrl.u32 %v1122, 7
          %v1124 = vsub.s32 1, %v1123
          %v1125 = vrot.slane %v1103, %v1124
          %v1128 = vmul.f32 %v1079, %v1121
          %v1129 = vmul.f32 %v1080, %v1125
          %v1130 = vmul.f32 %v1081, %v1121
          %v1131 = vmul.f32 %v1082, %v1125
          %v1132 = vmul.f32 %v1083, %v1121
          %v1133 = vmul.f32 %v1084, %v1125
          %v1134 = vmul.f32 %v1085, %v1121
          %v1135 = vmul.f32 %v1086, %v1125
          %v1136 = vmul.f32 %v1087, %v1121
          %v1137 = vmul.f32 %v1088, %v1125
          %v1138 = vmul.f32 %v1089, %v1121
          %v1139 = vmul.f32 %v1090, %v1125
          %v1140 = vmul.f32 %v1091, %v1121
          %v1141 = vmul.f32 %v1092, %v1125
          %v1142 = vmul.f32 %v1093, %v1121
          %v1143 = vmul.f32 %v1094, %v1125
          %v1144 = vmul.f32 %v1095, %v1121
          %v1145 = vmul.f32 %v1096, %v1125
          %v1146 = vmul.f32 %v1097, %v1121
          %v1147 = vmul.f32 %v1098, %v1125
          %v1148 = vmul.f32 %v1099, %v1121
          %v1149 = vmul.f32 %v1100, %v1125
          %v1150 = vmul.f32 %v1101, %v1121
          %v1151 = vmul.f32 %v1102, %v1125
          %v1153 = vlaneseq
          %v1154 = vshrl.u32 %v1153, 7
          %v1155 = vsub.s32 0, %v1154
          %v1156 = vrot.slane %v1104, %v1155
          %v1157 = vlaneseq
          %v1158 = vshrl.u32 %v1157, 7
          %v1159 = vsub.s32 1, %v1158
          %v1160 = vrot.slane %v1104, %v1159
          %v1163 = vadd.f32 %v1128, %v1156
          %v1164 = vadd.f32 %v1129, %v1160
          %v1165 = vadd.f32 %v1130, %v1156
          %v1166 = vadd.f32 %v1131, %v1160
          %v1167 = vadd.f32 %v1132, %v1156
          %v1168 = vadd.f32 %v1133, %v1160
          %v1169 = vadd.f32 %v1134, %v1156
          %v1170 = vadd.f32 %v1135, %v1160
          %v1171 = vadd.f32 %v1136, %v1156
          %v1172 = vadd.f32 %v1137, %v1160
          %v1173 = vadd.f32 %v1138, %v1156
          %v1174 = vadd.f32 %v1139, %v1160
          %v1175 = vadd.f32 %v1140, %v1156
          %v1176 = vadd.f32 %v1141, %v1160
          %v1177 = vadd.f32 %v1142, %v1156
          %v1178 = vadd.f32 %v1143, %v1160
          %v1179 = vadd.f32 %v1144, %v1156
          %v1180 = vadd.f32 %v1145, %v1160
          %v1181 = vadd.f32 %v1146, %v1156
          %v1182 = vadd.f32 %v1147, %v1160
          %v1183 = vadd.f32 %v1148, %v1156
          %v1184 = vadd.f32 %v1149, %v1160
          %v1185 = vadd.f32 %v1150, %v1156
          %v1186 = vadd.f32 %v1151, %v1160
          %v1187 = vunpack.c.l.bf16 %v1105
          %v1188 = vunpack.c.h.bf16 %v1105
          %v1189 = vunpack.c.l.bf16 %v1106
          %v1190 = vunpack.c.h.bf16 %v1106
          %v1191 = vunpack.c.l.bf16 %v1107
          %v1192 = vunpack.c.h.bf16 %v1107
          %v1193 = vunpack.c.l.bf16 %v1108
          %v1194 = vunpack.c.h.bf16 %v1108
          %v1195 = vunpack.c.l.bf16 %v1109
          %v1196 = vunpack.c.h.bf16 %v1109
          %v1197 = vunpack.c.l.bf16 %v1110
          %v1198 = vunpack.c.h.bf16 %v1110
          %v1199 = vunpack.c.l.bf16 %v1111
          %v1200 = vunpack.c.h.bf16 %v1111
          %v1201 = vunpack.c.l.bf16 %v1112
          %v1202 = vunpack.c.h.bf16 %v1112
          %v1203 = vunpack.c.l.bf16 %v1113
          %v1204 = vunpack.c.h.bf16 %v1113
          %v1205 = vunpack.c.l.bf16 %v1114
          %v1206 = vunpack.c.h.bf16 %v1114
          %v1207 = vunpack.c.l.bf16 %v1115
          %v1208 = vunpack.c.h.bf16 %v1115
          %v1209 = vunpack.c.l.bf16 %v1116
          %v1210 = vunpack.c.h.bf16 %v1116
          %v1211 = vadd.f32 %v1163, %v1187
          %v1212 = vadd.f32 %v1164, %v1188
          %v1213 = vadd.f32 %v1165, %v1189
          %v1214 = vadd.f32 %v1166, %v1190
          %v1215 = vadd.f32 %v1167, %v1191
          %v1216 = vadd.f32 %v1168, %v1192
          %v1217 = vadd.f32 %v1169, %v1193
          %v1218 = vadd.f32 %v1170, %v1194
          %v1219 = vadd.f32 %v1171, %v1195
          %v1220 = vadd.f32 %v1172, %v1196
          %v1221 = vadd.f32 %v1173, %v1197
          %v1222 = vadd.f32 %v1174, %v1198
          %v1223 = vadd.f32 %v1175, %v1199
          %v1224 = vadd.f32 %v1176, %v1200
          %v1225 = vadd.f32 %v1177, %v1201
          %v1226 = vadd.f32 %v1178, %v1202
          %v1227 = vadd.f32 %v1179, %v1203
          %v1228 = vadd.f32 %v1180, %v1204
          %v1229 = vadd.f32 %v1181, %v1205
          %v1230 = vadd.f32 %v1182, %v1206
          %v1231 = vadd.f32 %v1183, %v1207
          %v1232 = vadd.f32 %v1184, %v1208
          %v1233 = vadd.f32 %v1185, %v1209
          %v1234 = vadd.f32 %v1186, %v1210
          %v1235 = vmax.f32 %v1211, 0.0
          %v1236 = vmax.f32 %v1212, 0.0
          %v1237 = vmax.f32 %v1213, 0.0
          %v1238 = vmax.f32 %v1214, 0.0
          %v1239 = vmax.f32 %v1215, 0.0
          %v1240 = vmax.f32 %v1216, 0.0
          %v1241 = vmax.f32 %v1217, 0.0
          %v1242 = vmax.f32 %v1218, 0.0
          %v1243 = vmax.f32 %v1219, 0.0
          %v1244 = vmax.f32 %v1220, 0.0
          %v1245 = vmax.f32 %v1221, 0.0
          %v1246 = vmax.f32 %v1222, 0.0
          %v1247 = vmax.f32 %v1223, 0.0
          %v1248 = vmax.f32 %v1224, 0.0
          %v1249 = vmax.f32 %v1225, 0.0
          %v1250 = vmax.f32 %v1226, 0.0
          %v1251 = vmax.f32 %v1227, 0.0
          %v1252 = vmax.f32 %v1228, 0.0
          %v1253 = vmax.f32 %v1229, 0.0
          %v1254 = vmax.f32 %v1230, 0.0
          %v1255 = vmax.f32 %v1231, 0.0
          %v1256 = vmax.f32 %v1232, 0.0
          %v1257 = vmax.f32 %v1233, 0.0
          %v1258 = vmax.f32 %v1234, 0.0
          %1259 = vst [vmem:[#allocation9] sm:$0xff] %v1235
          %1260 = vst [vmem:[#allocation9 + $0x8] sm:$0xff] %v1236
          %1261 = vst [vmem:[#allocation9 + $0x10] sm:$0xff] %v1237
          %1262 = vst [vmem:[#allocation9 + $0x18] sm:$0xff] %v1238
          %1263 = vst [vmem:[#allocation9 + $0x20] sm:$0xff] %v1239
          %1264 = vst [vmem:[#allocation9 + $0x28] sm:$0xff] %v1240
          %1265 = vst [vmem:[#allocation9 + $0x30] sm:$0xff] %v1241
          %1266 = vst [vmem:[#allocation9 + $0x38] sm:$0xff] %v1242
          %1267 = vst [vmem:[#allocation9 + $0x40] sm:$0xff] %v1243
          %1268 = vst [vmem:[#allocation9 + $0x48] sm:$0xff] %v1244
          %1269 = vst [vmem:[#allocation9 + $0x50] sm:$0xff] %v1245
          %1270 = vst [vmem:[#allocation9 + $0x58] sm:$0xff] %v1246
          %1271 = vst [vmem:[#allocation9 + $0x60] sm:$0xff] %v1247
          %1272 = vst [vmem:[#allocation9 + $0x68] sm:$0xff] %v1248
          %1273 = vst [vmem:[#allocation9 + $0x70] sm:$0xff] %v1249
          %1274 = vst [vmem:[#allocation9 + $0x78] sm:$0xff] %v1250
          %1275 = vst [vmem:[#allocation9 + $0x80] sm:$0xff] %v1251
          %1276 = vst [vmem:[#allocation9 + $0x88] sm:$0xff] %v1252
          %1277 = vst [vmem:[#allocation9 + $0x90] sm:$0xff] %v1253
          %1278 = vst [vmem:[#allocation9 + $0x98] sm:$0xff] %v1254
          %1279 = vst [vmem:[#allocation9 + $0xa0] sm:$0xff] %v1255
          %1280 = vst [vmem:[#allocation9 + $0xa8] sm:$0xff] %v1256
          %1281 = vst [vmem:[#allocation9 + $0xb0] sm:$0xff] %v1257
          %1282 = vst [vmem:[#allocation9 + $0xb8] sm:$0xff] %v1258
        $region60: #{tpu_custom_call.1} parent=39 // pred_fallthru
          _
        // Predicated region
        $region61: #{tpu_custom_call.1} parent=39 // pred_check
          %p1283 = pneg %p198
        $region62: #{tpu_custom_call.1} parent=39 // pred_check_branch
          %1285 = sbr.rel (%p1283) target = $region64
        $region63: #{tpu_custom_call.1} parent=39 // pred_region
          %s1286 = smul.u32 12, %s28
          %s1287 = smul.u32 2, %s29
          %s1289 = ssub.s32 3072, 3072
          %1290 = vsyncadd [#allocation5], %s1289
          %s1291 = smul.addr %s1286, 2
          %s1292 = sadd.s32 %s1287, %s1291
          %s1293 = smul.addr %s1292, 128
          %s1294 = scalar_lea.hbm %s5, %s1293
          %s1295 = sshll.u32 [#allocation9], 4
          %s1296 = int_to_ptr.vmem [resolvable:$true] %s1295
          %1301 = dma.vmem_to_hbm [thread:$0]  %s1296, 3072, %s1294, [#allocation5], 256, 256, 16
        $region64: #{tpu_custom_call.1} parent=39 // pred_fallthru
          _
        // Predicated region
        $region65: #{tpu_custom_call.1} parent=39 // pred_check
          %p1302 = pneg %p198
        $region66: #{tpu_custom_call.1} parent=39 // pred_check_branch
          %1304 = sbr.rel (%p1302) target = $region68
        $region67: #{tpu_custom_call.1} parent=39 // pred_region
          %1305 = dma.done [#allocation5], 3072
        $region68: #{tpu_custom_call.1} parent=39 // pred_fallthru
          _
      $region40: #{tpu_custom_call.1} parent=5 // pred_fallthru
        _
      %p1306 = scmp.le.s32.totalorder 2, %s18
      // Predicated region
      $region69: #{tpu_custom_call.1} parent=5 // pred_check
        %p1307 = pneg %p1306
      $region70: #{tpu_custom_call.1} parent=5 // pred_check_branch
        %1309 = sbr.rel (%p1307) target = $region72
      $region71: #{tpu_custom_call.1} parent=5 // pred_region
        %s1310 = ssub.s32 %s18, 2
      $region72: #{tpu_custom_call.1} parent=5 // pred_fallthru
        _
    $region6: #{tpu_custom_call.1} parent=1 // loop_footer
      %s22 = sadd.s32 1, %s18
    $region7: #{tpu_custom_call.1} parent=1 // loop_footer_branch
      %17 = sbr.rel target = $region3
    $region8: #{tpu_custom_call.1} parent=1 // loop_exit
      _
    %1311 = vsyncpa [#allocation4], 1
    %s1312 = scalar_lea.sflag [#allocation4], 1
    %1313 = vsyncpa %s1312, 1
    %1314 = vsyncpa [#allocation7], 1
    %s1315 = scalar_lea.sflag [#allocation7], 1
    %1316 = vsyncpa %s1315, 1
    %1317 = vsyncpa [#allocation5], 1
    %s1318 = scalar_lea.sflag [#allocation5], 1
    %1319 = vsyncpa %s1318, 1

</llo_original>
